<compile_context>
chip_gen: v5e
topology: v5e:2x2
jax: 0.10.0
libtpu: 0.0.40
codegen_flags: <defaults>
</compile_context>

<pallas_src>
import functools

import jax
import jax.numpy as jnp
from jax import lax
from jax.experimental import pallas as pl
from jax.experimental.pallas import tpu as pltpu

BN_EPS = 1e-5


# ---------------- shared in-kernel conv: KH matmuls over the phase tensors ----------------
def _conv_acc(wk_ref, u0_ref, u1_ref, *, KH, Wo, L):
    """wk_ref: (KH, Cout, KW*Cin); u*_ref: (1, KW*Cin, R*Wo).  Returns (Cout, L) f32."""
    u_refs = (u0_ref, u1_ref)
    acc = None
    for kh in range(KH):                       # statically unrolled (KH = 3)
        u_ref = u_refs[kh % 2]                 # row parity of this tap
        off = (kh // 2) * Wo                   # static row offset in the flattened phase
        rhs = u_ref[0, :, off:off + L]         # (KW*Cin, L) contiguous static slice
        part = jnp.dot(wk_ref[kh], rhs, preferred_element_type=jnp.float32)
        acc = part if acc is None else acc + part
    return acc


# ---------------- pass 1: per-image BN statistics only (no conv intermediate stored) -------
def conv_stats_kernel(wk_ref, u0_ref, u1_ref, ssum_ref, sm2_ref, *, KH, Wo, L):
    acc = _conv_acc(wk_ref, u0_ref, u1_ref, KH=KH, Wo=Wo, L=L)    # (Cout, L) f32
    s = jnp.sum(acc, axis=1, keepdims=True)                       # (Cout, 1)
    mu = s * (1.0 / L)
    d = acc - mu
    m2 = jnp.sum(d * d, axis=1, keepdims=True)                    # centered 2nd moment
    ssum_ref[...] = s[None]
    sm2_ref[...] = m2[None]


# ---------------- pass 2: recompute conv + fused BN scale/shift + ReLU ---------------------
def conv_bn_relu_kernel(wk_ref, u0_ref, u1_ref, scale_ref, shift_ref, o_ref, *, KH, Wo, L):
    acc = _conv_acc(wk_ref, u0_ref, u1_ref, KH=KH, Wo=Wo, L=L)    # identical to pass 1
    y = acc * scale_ref[...] + shift_ref[...]                     # per-channel affine
    o_ref[...] = jnp.maximum(y, 0.0)[None].astype(o_ref.dtype)


def conv_block_forward(x, w, gamma, beta, bias=None, *, stride=2, padding=1,
                       compute_dtype=jnp.bfloat16, out_dtype=jnp.float32):
    """x: (N, Cin, H, W) NCHW; w: (Cout, Cin, KH, KW). Returns (N, Cout, Ho, Wo).

    `bias` is accepted for API parity but unused: train-mode BatchNorm subtracts
    the per-channel batch mean right after the conv, which cancels it exactly.
    """
    del bias
    N, Cin, H, W = x.shape
    Cout, Cin_w, KH, KW = w.shape
    assert Cin_w == Cin
    assert stride == 2, "row-phase layout assumes stride == 2"
    Ho = (H + 2 * padding - KH) // stride + 1
    Wo = (W + 2 * padding - KW) // stride + 1
    L = Ho * Wo                 # output positions per image (lane axis in the kernels)
    M = N * L                   # total BN reduction size
    kc = KW * Cin               # contraction size of each per-kh matmul

    # ---- row-phase decomposition of the padded input (plain JAX, ~1.5x input size) ----
    # U[p][n, kw*Cin + cin, r*Wo + wo] = x_pad[n, cin, 2*r + p, 2*wo + kw], so the tap
    # (kh, kw) slab for a whole image is the contiguous slice
    # U[kh % 2][n, :, (kh//2)*Wo : (kh//2)*Wo + L]  -> clean 2-D MXU matmul RHS.
    R = Ho + (KH - 1) // 2
    Hp = max(H + 2 * padding, 2 * R)
    Wp = max(W + 2 * padding, 2 * (Wo - 1) + KW)
    x_pad = jnp.pad(x, ((0, 0), (0, 0),
                        (padding, Hp - H - padding),
                        (padding, Wp - W - padding)))
    phases = []
    for p in range(2):
        taps = [x_pad[:, :, p:p + 2 * R:2, kw:kw + 2 * Wo:2] for kw in range(KW)]
        u = jnp.stack(taps, axis=1)                              # (N, KW, Cin, R, Wo)
        phases.append(u.reshape(N, kc, R * Wo).astype(compute_dtype))
    u0, u1 = phases

    # weights: (Cout, Cin, KH, KW) -> (KH, Cout, KW*Cin); column order (kw, cin) matches U.
    wk = jnp.transpose(w, (2, 0, 3, 1)).reshape(KH, Cout, kc).astype(compute_dtype)

    # ---- VMEM budget from the actual block sizes (review item), not a blanket 48 MiB ----
    in_sz = jnp.dtype(compute_dtype).itemsize
    u_bytes = kc * R * Wo * in_sz
    wk_bytes = KH * Cout * kc * in_sz
    out_bytes = Cout * L * jnp.dtype(out_dtype).itemsize
    acc_bytes = Cout * L * 4
    vmem_limit = int(2 * (2 * u_bytes + wk_bytes + out_bytes) + 4 * acc_bytes + (16 << 20))
    cparams = pltpu.CompilerParams(
        dimension_semantics=("parallel",),       # batch axis -> both v7x TensorCores
        vmem_limit_bytes=min(vmem_limit, 100 << 20),
    )

    u_spec = pl.BlockSpec((1, kc, R * Wo), lambda n: (n, 0, 0))
    w_spec = pl.BlockSpec((KH, Cout, kc), lambda n: (0, 0, 0))   # resident across the grid

    # ---- pass 1: per-image BN sums / centered second moments ----
    ssum, sm2 = pl.pallas_call(
        functools.partial(conv_stats_kernel, KH=KH, Wo=Wo, L=L),
        out_shape=(jax.ShapeDtypeStruct((N, Cout, 1), jnp.float32),
                   jax.ShapeDtypeStruct((N, Cout, 1), jnp.float32)),
        grid=(N,),
        in_specs=[w_spec, u_spec, u_spec],
        out_specs=(pl.BlockSpec((1, Cout, 1), lambda n: (n, 0, 0)),
                   pl.BlockSpec((1, Cout, 1), lambda n: (n, 0, 0))),
        compiler_params=cparams,
    )(wk, u0, u1)

    # ---- tiny per-channel Chan/Welford combine + BN folding (plain JAX, f32) ----
    sum_c = jnp.sum(ssum[:, :, 0], axis=0)                       # (Cout,)
    mean = sum_c / M
    mean_i = ssum[:, :, 0] / L                                   # (N, Cout) per-image means
    m2_c = jnp.sum(sm2[:, :, 0], axis=0) + L * jnp.sum((mean_i - mean[None, :]) ** 2, axis=0)
    var = jnp.maximum(m2_c / M, 0.0)                             # biased variance (train BN)
    scale = gamma.astype(jnp.float32) * lax.rsqrt(var + BN_EPS)
    shift = beta.astype(jnp.float32) - mean * scale

    # ---- pass 2: recompute conv + fused BN + ReLU, written directly in N,C,(Ho*Wo) ----
    out = pl.pallas_call(
        functools.partial(conv_bn_relu_kernel, KH=KH, Wo=Wo, L=L),
        out_shape=jax.ShapeDtypeStruct((N, Cout, L), out_dtype),
        grid=(N,),
        in_specs=[w_spec, u_spec, u_spec,
                  pl.BlockSpec((Cout, 1), lambda n: (0, 0)),
                  pl.BlockSpec((Cout, 1), lambda n: (0, 0))],
        out_specs=pl.BlockSpec((1, Cout, L), lambda n: (n, 0, 0)),
        compiler_params=cparams,
    )(wk, u0, u1, scale.reshape(Cout, 1), shift.reshape(Cout, 1))

    return out.reshape(N, Cout, Ho, Wo)          # contiguous reshape; no transpose pass


def _reference(x, w, b, gamma, beta, *, stride=2, padding=1):
    """Pure-JAX reference of the PyTorch forward (train-mode BN), bias included."""
    y = lax.conv_general_dilated(
        x.astype(jnp.float32), w.astype(jnp.float32),
        window_strides=(stride, stride),
        padding=((padding, padding), (padding, padding)),
        dimension_numbers=("NCHW", "OIHW", "NCHW"),
        precision=lax.Precision.HIGHEST,
    ) + b.reshape(1, -1, 1, 1)
    mean = jnp.mean(y, axis=(0, 2, 3), keepdims=True)
    var = jnp.mean((y - mean) ** 2, axis=(0, 2, 3), keepdims=True)
    y = (y - mean) * lax.rsqrt(var + BN_EPS)
    y = y * gamma.reshape(1, -1, 1, 1) + beta.reshape(1, -1, 1, 1)
    return jnp.maximum(y, 0.0)


if __name__ == "__main__":
    key = jax.random.PRNGKey(0)
    k_x, k_w, k_b, k_g, k_be = jax.random.split(key, 5)

    N, Cin, H, W = 2, 3, 16, 16
    Cout, KH, KW = 32, 3, 3

    x = jax.random.normal(k_x, (N, Cin, H, W), dtype=jnp.float32)
    w = jax.random.normal(k_w, (Cout, Cin, KH, KW), dtype=jnp.float32) * 0.1
    b = jax.random.normal(k_b, (Cout,), dtype=jnp.float32) * 0.1
    gamma = 1.0 + 0.1 * jax.random.normal(k_g, (Cout,), dtype=jnp.float32)
    beta = 0.1 * jax.random.normal(k_be, (Cout,), dtype=jnp.float32)

    ref = jax.block_until_ready(_reference(x, w, b, gamma, beta, stride=2, padding=1))

    # f32 data path: validates layout/tap indexing, BN math, and the exact
    # bias-cancellation under train-mode BN.  (Tolerance leaves margin for MXU
    # f32 pass decomposition; typical observed error is ~1e-5.)
    out_f32 = jax.block_until_ready(
        conv_block_forward(x, w, gamma, beta, b, stride=2, padding=1,
                           compute_dtype=jnp.float32))
    assert out_f32.shape == (N, Cout, 8, 8), out_f32.shape
    err_f32 = float(jnp.max(jnp.abs(out_f32 - ref)))
    assert err_f32 < 2e-2, err_f32

    # bf16 fast path (native MXU dtype, halves the phase-tensor HBM stream).
    out_bf16 = jax.block_until_ready(
        conv_block_forward(x, w, gamma, beta, b, stride=2, padding=1,
                           compute_dtype=jnp.bfloat16))
    assert out_bf16.shape == (N, Cout, 8, 8), out_bf16.shape
    err_bf16 = float(jnp.max(jnp.abs(out_bf16 - ref)))
    assert err_bf16 < 1e-1, err_bf16

    print("KERNEL_OK")
</pallas_src>

<mosaic_0001>
module attributes {stable_mosaic.version = 11 : i64} {
  func.func @conv_stats_kernel(%arg0: i32, %arg1: memref<3x32x9xf32, #tpu.memory_space<vmem>>, %arg2: memref<1x9x72xf32, #tpu.memory_space<vmem>>, %arg3: memref<1x9x72xf32, #tpu.memory_space<vmem>>, %arg4: memref<1x32x1xf32, #tpu.memory_space<vmem>>, %arg5: memref<1x32x1xf32, #tpu.memory_space<vmem>>) attributes {dimension_semantics = [#tpu.dimension_semantics<parallel>], iteration_bounds = array<i64: 2>, scalar_prefetch = 0 : i64, scratch_operands = 0 : i64, tpu.core_type = #tpu.core_type<tc>, window_params = [{pipeline_mode = #tpu.pipeline_mode<synchronous>, transform_indices = @transform_0, window_bounds = array<i64: 3, 32, 9>}, {transform_indices = @transform_1, window_bounds = array<i64: 1, 9, 72>}, {transform_indices = @transform_2, window_bounds = array<i64: 1, 9, 72>}, {transform_indices = @transform_3, window_bounds = array<i64: 1, 32, 1>}, {transform_indices = @transform_4, window_bounds = array<i64: 1, 32, 1>}]} {
    %c0 = arith.constant 0 : index
    %c0_0 = arith.constant 0 : index
    %c0_1 = arith.constant 0 : index
    %0 = vector.load %arg2[%c0, %c0_0, %c0_1] : memref<1x9x72xf32, #tpu.memory_space<vmem>>, vector<1x9x64xf32>
    %1 = vector.shape_cast %0 : vector<1x9x64xf32> to vector<9x64xf32>
    %c0_2 = arith.constant 0 : index
    %c0_3 = arith.constant 0 : index
    %c0_4 = arith.constant 0 : index
    %2 = vector.load %arg1[%c0_2, %c0_3, %c0_4] : memref<3x32x9xf32, #tpu.memory_space<vmem>>, vector<1x32x9xf32>
    %3 = vector.shape_cast %2 : vector<1x32x9xf32> to vector<32x9xf32>
    %cst = arith.constant dense<0.000000e+00> : vector<32x64xf32>
    %4 = tpu.matmul %3, %1, %cst {dimension_numbers = #tpu.dot_dimension_numbers<[1], [0], [0], [1], [0, 0, 1, 1], [], []>} : vector<32x9xf32>, vector<9x64xf32>, vector<32x64xf32> -> vector<32x64xf32>
    %c0_5 = arith.constant 0 : index
    %c0_6 = arith.constant 0 : index
    %c0_7 = arith.constant 0 : index
    %5 = vector.load %arg3[%c0_5, %c0_6, %c0_7] : memref<1x9x72xf32, #tpu.memory_space<vmem>>, vector<1x9x64xf32>
    %6 = vector.shape_cast %5 : vector<1x9x64xf32> to vector<9x64xf32>
    %c1 = arith.constant 1 : index
    %c0_8 = arith.constant 0 : index
    %c0_9 = arith.constant 0 : index
    %7 = vector.load %arg1[%c1, %c0_8, %c0_9] : memref<3x32x9xf32, #tpu.memory_space<vmem>>, vector<1x32x9xf32>
    %8 = vector.shape_cast %7 : vector<1x32x9xf32> to vector<32x9xf32>
    %cst_10 = arith.constant dense<0.000000e+00> : vector<32x64xf32>
    %9 = tpu.matmul %8, %6, %cst_10 {dimension_numbers = #tpu.dot_dimension_numbers<[1], [0], [0], [1], [0, 0, 1, 1], [], []>} : vector<32x9xf32>, vector<9x64xf32>, vector<32x64xf32> -> vector<32x64xf32>
    %10 = arith.addf %4, %9 : vector<32x64xf32>
    %c0_11 = arith.constant 0 : index
    %c0_12 = arith.constant 0 : index
    %c8 = arith.constant 8 : index
    %11 = vector.load %arg2[%c0_11, %c0_12, %c8] : memref<1x9x72xf32, #tpu.memory_space<vmem>>, vector<1x9x64xf32>
    %12 = vector.shape_cast %11 : vector<1x9x64xf32> to vector<9x64xf32>
    %c2 = arith.constant 2 : index
    %c0_13 = arith.constant 0 : index
    %c0_14 = arith.constant 0 : index
    %13 = vector.load %arg1[%c2, %c0_13, %c0_14] : memref<3x32x9xf32, #tpu.memory_space<vmem>>, vector<1x32x9xf32>
    %14 = vector.shape_cast %13 : vector<1x32x9xf32> to vector<32x9xf32>
    %cst_15 = arith.constant dense<0.000000e+00> : vector<32x64xf32>
    %15 = tpu.matmul %14, %12, %cst_15 {dimension_numbers = #tpu.dot_dimension_numbers<[1], [0], [0], [1], [0, 0, 1, 1], [], []>} : vector<32x9xf32>, vector<9x64xf32>, vector<32x64xf32> -> vector<32x64xf32>
    %16 = arith.addf %10, %15 : vector<32x64xf32>
    %cst_16 = arith.constant dense<0.000000e+00> : vector<32xf32>
    %17 = vector.multi_reduction <add>, %16, %cst_16 [1] : vector<32x64xf32> to vector<32xf32>
    %18 = vector.shape_cast %17 : vector<32xf32> to vector<32x1xf32>
    %cst_17 = arith.constant 1.562500e-02 : f32
    %19 = vector.broadcast %cst_17 : f32 to vector<32x1xf32>
    %20 = arith.mulf %18, %19 : vector<32x1xf32>
    %21 = vector.broadcast %20 : vector<32x1xf32> to vector<32x64xf32>
    %22 = arith.subf %16, %21 : vector<32x64xf32>
    %23 = arith.mulf %22, %22 : vector<32x64xf32>
    %cst_18 = arith.constant dense<0.000000e+00> : vector<32xf32>
    %24 = vector.multi_reduction <add>, %23, %cst_18 [1] : vector<32x64xf32> to vector<32xf32>
    %25 = vector.shape_cast %24 : vector<32xf32> to vector<32x1xf32>
    %26 = vector.shape_cast %18 : vector<32x1xf32> to vector<1x32x1xf32>
    %c0_19 = arith.constant 0 : index
    %c0_20 = arith.constant 0 : index
    %c0_21 = arith.constant 0 : index
    %27 = vector.load %arg4[%c0_19, %c0_20, %c0_21] : memref<1x32x1xf32, #tpu.memory_space<vmem>>, vector<1x32x1xf32>
    tpu.vector_store %arg4[%c0_19, %c0_20, %c0_21], %26 {strides = array<i32>} : memref<1x32x1xf32, #tpu.memory_space<vmem>>, vector<1x32x1xf32>,
    %28 = vector.shape_cast %25 : vector<32x1xf32> to vector<1x32x1xf32>
    %c0_22 = arith.constant 0 : index
    %c0_23 = arith.constant 0 : index
    %c0_24 = arith.constant 0 : index
    %29 = vector.load %arg5[%c0_22, %c0_23, %c0_24] : memref<1x32x1xf32, #tpu.memory_space<vmem>>, vector<1x32x1xf32>
    tpu.vector_store %arg5[%c0_22, %c0_23, %c0_24], %28 {strides = array<i32>} : memref<1x32x1xf32, #tpu.memory_space<vmem>>, vector<1x32x1xf32>,
    return
  }
  func.func @transform_0(%arg0: i32) -> (i32, i32, i32) {
    %c0_i32 = arith.constant 0 : i32
    %c0_i32_0 = arith.constant 0 : i32
    %c0_i32_1 = arith.constant 0 : i32
    %c0_i32_2 = arith.constant 0 : i32
    return %c0_i32, %c0_i32_0, %c0_i32_1 : i32, i32, i32
  }
  func.func @transform_1(%arg0: i32) -> (i32, i32, i32) {
    %c0_i32 = arith.constant 0 : i32
    %c0_i32_0 = arith.constant 0 : i32
    %c0_i32_1 = arith.constant 0 : i32
    return %arg0, %c0_i32, %c0_i32_0 : i32, i32, i32
  }
  func.func @transform_2(%arg0: i32) -> (i32, i32, i32) {
    %c0_i32 = arith.constant 0 : i32
    %c0_i32_0 = arith.constant 0 : i32
    %c0_i32_1 = arith.constant 0 : i32
    return %arg0, %c0_i32, %c0_i32_0 : i32, i32, i32
  }
  func.func @transform_3(%arg0: i32) -> (i32, i32, i32) {
    %c0_i32 = arith.constant 0 : i32
    %c0_i32_0 = arith.constant 0 : i32
    %c0_i32_1 = arith.constant 0 : i32
    return %arg0, %c0_i32, %c0_i32_0 : i32, i32, i32
  }
  func.func @transform_4(%arg0: i32) -> (i32, i32, i32) {
    %c0_i32 = arith.constant 0 : i32
    %c0_i32_0 = arith.constant 0 : i32
    %c0_i32_1 = arith.constant 0 : i32
    return %arg0, %c0_i32, %c0_i32_0 : i32, i32, i32
  }
}

</mosaic_0001>

<llo_original>
// kernel: tpu_custom_call.1
$region0: #{tpu_custom_call.1}
  #allocation0 [shape = 'u32[]', space=smem, size = 0x4, offset = 0x4, fixed_abs, tag = 'smem constant byte address 0x4 - core index']
  #allocation1 [shape = 'u32[72,128]{1,0:T(1,128)}', space=vmem, size = 0x9000, scoped, tag = 'internal scratch']
  %s0 = inlined_call_operand.vmem [shape: f32[3,32,9], index: 0, kind: input, shape index: {}]
  %s1 = inlined_call_operand.vmem [shape: f32[2,9,72], index: 1, kind: input, shape index: {}]
  %s2 = inlined_call_operand.vmem [shape: f32[2,9,72], index: 2, kind: input, shape index: {}]
  %s3 = inlined_call_operand.vmem [shape: f32[2,32,1], index: 3, kind: output, shape index: {0}]
  %s4 = inlined_call_operand.vmem [shape: f32[2,32,1], index: 4, kind: output, shape index: {1}]
  %5 = xla_tuple %s3, %s4
  %s6 = sld [smem:[#allocation0]]
  $region53: #{tpu_custom_call.1} parent=0
    _
  %s8 = ssub.s32 1, %s6
  %s9 = scalar_select 0, %s8, %s6
  loop: start=0, step=1, limit=4
  $region2: #{tpu_custom_call.1} parent=0 // loop_pre_header
    _
  $region3: #{tpu_custom_call.1} parent=0 // loop_header
    %s11 = sphi 0, %s15
    %p12 = scmp.ge.s32.totalorder %s11, 4
    %s19 = sphi 0, %s19
    %s21 = sphi 0, %s19
    %s22 = sphi 0, %s21
    %s36 = sphi 0, %s22
    %s42 = sphi 0, %s44
    %s45 = sphi 0, %s42
    %s46 = sphi 0, %s45
    %s62 = sphi 0, %s46
    %s68 = sphi 0, %s70
    %s71 = sphi 0, %s68
    %s72 = sphi 0, %s71
    %s88 = sphi 0, %s72
    %s94 = sphi 0, %s96
    %s97 = sphi 0, %s94
    %s98 = sphi 0, %s97
    %s114 = sphi 0, %s98
    %s120 = sphi 0, %s122
    %s123 = sphi 0, %s120
    %s124 = sphi 0, %s123
    %s140 = sphi 0, %s124
  $region4: #{tpu_custom_call.1} parent=0 // loop_header_branch
    %14 = sbr.rel (%p12) target = $region8
  $region5: #{tpu_custom_call.1} parent=0 // loop_body
    %s16 = ssub.s32 %s11, 1
    %s17 = ssub.s32 %s11, 2
    %s18 = sadd.s32 %s11, 1
    %s20 = sadd.s32 %s19, 1
    %p23 = scmp.eq.s32.totalorder %s11, 1
    %p24 = scmp.ne.s32.totalorder %s19, %s21
    %p25 = scmp.eq.s32.totalorder %s11, 0
    %p26 = por %p24, %p25
    %p27 = scmp.ne.s32.totalorder %s19, %s21
    %p28 = scmp.eq.s32.totalorder %s16, 1
    %p29 = por %p27, %p28
    %p30 = scmp.ne.s32.totalorder %s21, %s22
    %p31 = scmp.eq.s32.totalorder %s16, 0
    %p32 = por %p30, %p31
    %p33 = scmp.ne.s32.totalorder %s21, %s22
    %p34 = scmp.eq.s32.totalorder %s17, 1
    %p35 = por %p33, %p34
    %p37 = scmp.ne.s32.totalorder %s22, %s36
    %p38 = scmp.eq.s32.totalorder %s17, 0
    %p39 = por %p37, %p38
    %s40 = ssub.s32 %s11, %s18
    %p41 = scmp.eq.s32.totalorder %s40, 0
    %s43 = sadd.s32 %s42, 1
    %s44 = scalar_select %p41, %s42, %s43
    %p47 = pneg %p41
    %p48 = scmp.eq.s32.totalorder %s11, 1
    %p49 = por %p47, %p48
    %p50 = scmp.ne.s32.totalorder %s42, %s45
    %p51 = scmp.eq.s32.totalorder %s11, 0
    %p52 = por %p50, %p51
    %p53 = scmp.ne.s32.totalorder %s42, %s45
    %p54 = scmp.eq.s32.totalorder %s16, 1
    %p55 = por %p53, %p54
    %p56 = scmp.ne.s32.totalorder %s45, %s46
    %p57 = scmp.eq.s32.totalorder %s16, 0
    %p58 = por %p56, %p57
    %p59 = scmp.ne.s32.totalorder %s45, %s46
    %p60 = scmp.eq.s32.totalorder %s17, 1
    %p61 = por %p59, %p60
    %p63 = scmp.ne.s32.totalorder %s46, %s62
    %p64 = scmp.eq.s32.totalorder %s17, 0
    %p65 = por %p63, %p64
    %s66 = ssub.s32 %s11, %s18
    %p67 = scmp.eq.s32.totalorder %s66, 0
    %s69 = sadd.s32 %s68, 1
    %s70 = scalar_select %p67, %s68, %s69
    %p73 = pneg %p67
    %p74 = scmp.eq.s32.totalorder %s11, 1
    %p75 = por %p73, %p74
    %p76 = scmp.ne.s32.totalorder %s68, %s71
    %p77 = scmp.eq.s32.totalorder %s11, 0
    %p78 = por %p76, %p77
    %p79 = scmp.ne.s32.totalorder %s68, %s71
    %p80 = scmp.eq.s32.totalorder %s16, 1
    %p81 = por %p79, %p80
    %p82 = scmp.ne.s32.totalorder %s71, %s72
    %p83 = scmp.eq.s32.totalorder %s16, 0
    %p84 = por %p82, %p83
    %p85 = scmp.ne.s32.totalorder %s71, %s72
    %p86 = scmp.eq.s32.totalorder %s17, 1
    %p87 = por %p85, %p86
    %p89 = scmp.ne.s32.totalorder %s72, %s88
    %p90 = scmp.eq.s32.totalorder %s17, 0
    %p91 = por %p89, %p90
    %s92 = ssub.s32 %s11, %s18
    %p93 = scmp.eq.s32.totalorder %s92, 0
    %s95 = sadd.s32 %s94, 1
    %s96 = scalar_select %p93, %s94, %s95
    %p99 = pneg %p93
    %p100 = scmp.eq.s32.totalorder %s11, 1
    %p101 = por %p99, %p100
    %p102 = scmp.ne.s32.totalorder %s94, %s97
    %p103 = scmp.eq.s32.totalorder %s11, 0
    %p104 = por %p102, %p103
    %p105 = scmp.ne.s32.totalorder %s94, %s97
    %p106 = scmp.eq.s32.totalorder %s16, 1
    %p107 = por %p105, %p106
    %p108 = scmp.ne.s32.totalorder %s97, %s98
    %p109 = scmp.eq.s32.totalorder %s16, 0
    %p110 = por %p108, %p109
    %p111 = scmp.ne.s32.totalorder %s97, %s98
    %p112 = scmp.eq.s32.totalorder %s17, 1
    %p113 = por %p111, %p112
    %p115 = scmp.ne.s32.totalorder %s98, %s114
    %p116 = scmp.eq.s32.totalorder %s17, 0
    %p117 = por %p115, %p116
    %s118 = ssub.s32 %s11, %s18
    %p119 = scmp.eq.s32.totalorder %s118, 0
    %s121 = sadd.s32 %s120, 1
    %s122 = scalar_select %p119, %s120, %s121
    %p125 = pneg %p119
    %p126 = scmp.eq.s32.totalorder %s11, 1
    %p127 = por %p125, %p126
    %p128 = scmp.ne.s32.totalorder %s120, %s123
    %p129 = scmp.eq.s32.totalorder %s11, 0
    %p130 = por %p128, %p129
    %p131 = scmp.ne.s32.totalorder %s120, %s123
    %p132 = scmp.eq.s32.totalorder %s16, 1
    %p133 = por %p131, %p132
    %p134 = scmp.ne.s32.totalorder %s123, %s124
    %p135 = scmp.eq.s32.totalorder %s16, 0
    %p136 = por %p134, %p135
    %p137 = scmp.ne.s32.totalorder %s123, %s124
    %p138 = scmp.eq.s32.totalorder %s17, 1
    %p139 = por %p137, %p138
    %p141 = scmp.ne.s32.totalorder %s124, %s140
    %p142 = scmp.eq.s32.totalorder %s17, 0
    %p143 = por %p141, %p142
    %p144 = scmp.le.s32.totalorder 1, %s11
    %p145 = scmp.lt.s32.totalorder %s11, 3
    %p146 = pnand %p144, %p145
    %p147 = pneg %p146
    // Predicated region
    $region9: #{tpu_custom_call.1} parent=5 // pred_check
      _
    $region10: #{tpu_custom_call.1} parent=5 // pred_check_branch
      %149 = sbr.rel (%p146) target = $region12
    $region11: #{tpu_custom_call.1} parent=5 // pred_region
      %s150 = ssub.s32 %s11, 1
      // Predicated region
      $region13: #{tpu_custom_call.1} parent=11 // pred_check
        %p151 = pneg %p32
      $region14: #{tpu_custom_call.1} parent=11 // pred_check_branch
        %153 = sbr.rel (%p151) target = $region16
      $region15: #{tpu_custom_call.1} parent=11 // pred_region
        _
      $region16: #{tpu_custom_call.1} parent=11 // pred_fallthru
        _
    $region12: #{tpu_custom_call.1} parent=5 // pred_fallthru
      _
    %p154 = scmp.lt.s32.totalorder %s11, 2
    // Predicated region
    $region17: #{tpu_custom_call.1} parent=5 // pred_check
      %p155 = pneg %p154
    $region18: #{tpu_custom_call.1} parent=5 // pred_check_branch
      %157 = sbr.rel (%p155) target = $region20
    $region19: #{tpu_custom_call.1} parent=5 // pred_region
      // Predicated region
      $region21: #{tpu_custom_call.1} parent=19 // pred_check
        %p158 = pneg %p52
      $region22: #{tpu_custom_call.1} parent=19 // pred_check_branch
        %160 = sbr.rel (%p158) target = $region24
      $region23: #{tpu_custom_call.1} parent=19 // pred_region
        %p161 = scmp.lt.s32.totalorder %s11, 1
        %s162 = scalar_select %p161, %s11, 1
        %s163 = smul.addr %s162, 2
        %s164 = smul.addr %s163, 8
        %s165 = scalar_lea.vmem %s1, %s164
      $region24: #{tpu_custom_call.1} parent=19 // pred_fallthru
        _
      // Predicated region
      $region25: #{tpu_custom_call.1} parent=19 // pred_check
        %p166 = pneg %p78
      $region26: #{tpu_custom_call.1} parent=19 // pred_check_branch
        %168 = sbr.rel (%p166) target = $region28
      $region27: #{tpu_custom_call.1} parent=19 // pred_region
        %p169 = scmp.lt.s32.totalorder %s11, 1
        %s170 = scalar_select %p169, %s11, 1
        %s171 = smul.addr %s170, 2
        %s172 = smul.addr %s171, 8
        %s173 = scalar_lea.vmem %s2, %s172
      $region28: #{tpu_custom_call.1} parent=19 // pred_fallthru
        _
    $region20: #{tpu_custom_call.1} parent=5 // pred_fallthru
      _
    %p174 = scmp.le.s32.totalorder 1, %s11
    %p175 = scmp.lt.s32.totalorder %s11, 3
    %p176 = pnand %p174, %p175
    %p177 = pneg %p176
    // Predicated region
    $region29: #{tpu_custom_call.1} parent=5 // pred_check
      _
    $region30: #{tpu_custom_call.1} parent=5 // pred_check_branch
      %179 = sbr.rel (%p176) target = $region32
    $region31: #{tpu_custom_call.1} parent=5 // pred_region
      %s180 = ssub.s32 %s11, 1
      %p181 = pneg %p32
      %p182 = pneg %p29
      %p183 = scmp.lt.s32.totalorder %s16, 1
      %s184 = scalar_select %p183, %s16, 1
      %s185 = smul.addr %s184, 2
      %s186 = smul.addr %s185, 8
      %s187 = scalar_lea.vmem %s1, %s186
      %p188 = pneg %p58
      %p189 = pneg %p55
      %p190 = scmp.lt.s32.totalorder %s16, 1
      %s191 = scalar_select %p190, %s16, 1
      %s192 = smul.addr %s191, 2
      %s193 = smul.addr %s192, 8
      %s194 = scalar_lea.vmem %s2, %s193
      %p195 = pneg %p84
      %p196 = pneg %p81
      %p197 = pneg %p110
      %p198 = pneg %p107
      %p199 = scmp.lt.s32.totalorder %s16, 1
      %s200 = scalar_select %p199, %s16, 1
      %s201 = smul.addr %s200, 4
      %s202 = smul.addr %s201, 8
      %s203 = scalar_lea.vmem %s3, %s202
      %p204 = pneg %p136
      %p205 = pneg %p133
      %p206 = scmp.lt.s32.totalorder %s16, 1
      %s207 = scalar_select %p206, %s16, 1
      %s208 = smul.addr %s207, 4
      %s209 = smul.addr %s208, 8
      %s210 = scalar_lea.vmem %s4, %s209
      %p211 = scmp.lt.s32.totalorder %s16, 1
      %s212 = scalar_select %p211, %s16, 1
      %s213 = smul.addr %s212, 2
      %s214 = smul.addr %s213, 8
      %s215 = scalar_lea.vmem %s1, %s214
      %p216 = scmp.lt.s32.totalorder %s16, 1
      %s217 = scalar_select %p216, %s16, 1
      %s218 = smul.addr %s217, 2
      %s219 = smul.addr %s218, 8
      %s220 = scalar_lea.vmem %s2, %s219
      %p221 = scmp.lt.s32.totalorder %s16, 1
      %s222 = scalar_select %p221, %s16, 1
      %s223 = smul.addr %s222, 4
      %s224 = smul.addr %s223, 8
      %s225 = scalar_lea.vmem %s3, %s224
      %p226 = scmp.lt.s32.totalorder %s16, 1
      %s227 = scalar_select %p226, %s16, 1
      %s228 = smul.addr %s227, 4
      %s229 = smul.addr %s228, 8
      %s230 = scalar_lea.vmem %s4, %s229
      %v231 = vld [vmem:[%s215] sm:$0xff]
      %v232 = vld [vmem:[%s215 + $0x8] sm:$0x1]
      %v233 = vld [vmem:[%s0] sm:$0xff]
      %v234 = vld [vmem:[%s0 + $0x8] sm:$0xff]
      %v235 = vld [vmem:[%s0 + $0x10] sm:$0xff]
      %v236 = vld [vmem:[%s0 + $0x18] sm:$0xff]
      %v237 = vld [vmem:[%s220] sm:$0xff]
      %v238 = vld [vmem:[%s220 + $0x8] sm:$0x1]
      %s239 = scalar_lea.vmem %s0, 32
      %v240 = vld [vmem:[%s239] sm:$0xff]
      %v241 = vld [vmem:[%s239 + $0x8] sm:$0xff]
      %v242 = vld [vmem:[%s239 + $0x10] sm:$0xff]
      %v243 = vld [vmem:[%s239 + $0x18] sm:$0xff]
      %vm244 = vcmask 72704
      %v246 = vsel %vm244, %v240, 0
      %v249 = vsel %vm244, %v241, 0
      %v252 = vsel %vm244, %v242, 0
      %v255 = vsel %vm244, %v243, 0
      %vm257 = vcmask 1040384
      %v259 = vsel %vm257, %v238, 0
      %261 = vmatpush.msra.mxu0 0.0
      %262 = vmatpush.msra.mxu0 0.0
      %263 = vmatpush.msra.mxu0 0.0
      %264 = vmatpush.msra.mxu0 0.0
      %265 = vmatpush.msra.mxu0 0.0
      %266 = vmatpush.msra.mxu0 0.0
      %267 = vmatpush.msra.mxu0 0.0
      %268 = vmatpush.msra.mxu0 0.0
      %269 = vmatpush.msra.mxu0 0.0
      %270 = vmatpush.msra.mxu0 0.0
      %271 = vmatpush.msra.mxu0 0.0
      %272 = vmatpush.msra.mxu0 0.0
      %273 = vmatpush.msra.mxu0 0.0
      %274 = vmatpush.msra.mxu0 0.0
      %275 = vmatpush.msra.mxu0 %v259
      %276 = vmatpush.msra.mxu0 %v237
      %277 = vmatmul.f32.gmra.mxu0 %v246
      %v278 = vpop.f32.mrf.mxu0
      %v279 = vadd.f32 0.0, %v278
      %280 = vmatmul.f32.gmra.mxu0 %v249
      %v281 = vpop.f32.mrf.mxu0
      %v282 = vadd.f32 0.0, %v281
      %283 = vmatmul.f32.gmra.mxu0 %v252
      %v284 = vpop.f32.mrf.mxu0
      %v285 = vadd.f32 0.0, %v284
      %286 = vmatmul.f32.gmra.mxu0 %v255
      %v287 = vpop.f32.mrf.mxu0
      %v288 = vadd.f32 0.0, %v287
      %289 = vdwg.mxu0
      %v291 = vsel %vm244, %v233, 0
      %v294 = vsel %vm244, %v234, 0
      %v297 = vsel %vm244, %v235, 0
      %v300 = vsel %vm244, %v236, 0
      %v303 = vsel %vm257, %v232, 0
      %305 = vmatpush.msra.mxu0 0.0
      %306 = vmatpush.msra.mxu0 0.0
      %307 = vmatpush.msra.mxu0 0.0
      %308 = vmatpush.msra.mxu0 0.0
      %309 = vmatpush.msra.mxu0 0.0
      %310 = vmatpush.msra.mxu0 0.0
      %311 = vmatpush.msra.mxu0 0.0
      %312 = vmatpush.msra.mxu0 0.0
      %313 = vmatpush.msra.mxu0 0.0
      %314 = vmatpush.msra.mxu0 0.0
      %315 = vmatpush.msra.mxu0 0.0
      %316 = vmatpush.msra.mxu0 0.0
      %317 = vmatpush.msra.mxu0 0.0
      %318 = vmatpush.msra.mxu0 0.0
      %319 = vmatpush.msra.mxu0 %v303
      %320 = vmatpush.msra.mxu0 %v231
      %321 = vmatmul.f32.gmra.mxu0 %v291
      %v322 = vpop.f32.mrf.mxu0
      %v323 = vadd.f32 %v279, %v322
      %324 = vmatmul.f32.gmra.mxu0 %v294
      %v325 = vpop.f32.mrf.mxu0
      %v326 = vadd.f32 %v282, %v325
      %327 = vmatmul.f32.gmra.mxu0 %v297
      %v328 = vpop.f32.mrf.mxu0
      %v329 = vadd.f32 %v285, %v328
      %330 = vmatmul.f32.gmra.mxu0 %v300
      %v331 = vpop.f32.mrf.mxu0
      %v332 = vadd.f32 %v288, %v331
      %333 = vdwg.mxu0
      %s334 = scalar_lea.vmem %s0, 64
      %v335 = vld [vmem:[%s334] sm:$0xff]
      %v336 = vld [vmem:[%s334 + $0x8] sm:$0xff]
      %v337 = vld [vmem:[%s334 + $0x10] sm:$0xff]
      %v338 = vld [vmem:[%s334 + $0x18] sm:$0xff]
      %340 = vrot.lane.b32.xlu0 %v231, 120
      %v341 = vpop.permute.xlu0 %340
      %342 = vrot.lane.b32.xlu0 %v232, 120
      %v343 = vpop.permute.xlu0 %342
      %v346 = vsel %vm244, %v335, 0
      %v349 = vsel %vm244, %v336, 0
      %v352 = vsel %vm244, %v337, 0
      %v355 = vsel %vm244, %v338, 0
      %v357 = vsel %vm257, %v343, 0
      %359 = vmatpush.msra.mxu0 0.0
      %360 = vmatpush.msra.mxu0 0.0
      %361 = vmatpush.msra.mxu0 0.0
      %362 = vmatpush.msra.mxu0 0.0
      %363 = vmatpush.msra.mxu0 0.0
      %364 = vmatpush.msra.mxu0 0.0
      %365 = vmatpush.msra.mxu0 0.0
      %366 = vmatpush.msra.mxu0 0.0
      %367 = vmatpush.msra.mxu0 0.0
      %368 = vmatpush.msra.mxu0 0.0
      %369 = vmatpush.msra.mxu0 0.0
      %370 = vmatpush.msra.mxu0 0.0
      %371 = vmatpush.msra.mxu0 0.0
      %372 = vmatpush.msra.mxu0 0.0
      %373 = vmatpush.msra.mxu0 %v357
      %374 = vmatpush.msra.mxu0 %v341
      %375 = vmatmul.f32.gmra.mxu0 %v346
      %v376 = vpop.f32.mrf.mxu0
      %v377 = vadd.f32 0.0, %v376
      %378 = vmatmul.f32.gmra.mxu0 %v349
      %v379 = vpop.f32.mrf.mxu0
      %v380 = vadd.f32 0.0, %v379
      %381 = vmatmul.f32.gmra.mxu0 %v352
      %v382 = vpop.f32.mrf.mxu0
      %v383 = vadd.f32 0.0, %v382
      %384 = vmatmul.f32.gmra.mxu0 %v355
      %v385 = vpop.f32.mrf.mxu0
      %v386 = vadd.f32 0.0, %v385
      %387 = vdwg.mxu0
      %v388 = vadd.f32 %v323, %v377
      %v389 = vadd.f32 %v326, %v380
      %v390 = vadd.f32 %v329, %v383
      %v391 = vadd.f32 %v332, %v386
      %vm392 = vcmask 523264
      %v393 = vsel %vm392, %v388, 0.0
      %394 = vadd.xlane.f32.xlu0 %v393
      %v395 = vpop.xlane.xlu0 %394
      %v396 = vsel %vm392, %v389, 0.0
      %397 = vadd.xlane.f32.xlu0 %v396
      %v398 = vpop.xlane.xlu0 %397
      %v399 = vsel %vm392, %v390, 0.0
      %400 = vadd.xlane.f32.xlu0 %v399
      %v401 = vpop.xlane.xlu0 %400
      %v402 = vsel %vm392, %v391, 0.0
      %403 = vadd.xlane.f32.xlu0 %v402
      %v404 = vpop.xlane.xlu0 %403
      %v405 = vmul.f32 %v395, 0.015625
      %v406 = vmul.f32 %v398, 0.015625
      %v407 = vmul.f32 %v401, 0.015625
      %v408 = vmul.f32 %v404, 0.015625
      %v409 = vsub.f32 %v388, %v405
      %v410 = vsub.f32 %v389, %v406
      %v411 = vsub.f32 %v390, %v407
      %v412 = vsub.f32 %v391, %v408
      %v413 = vmul.f32 %v409, %v409
      %v414 = vmul.f32 %v410, %v410
      %v415 = vmul.f32 %v411, %v411
      %v416 = vmul.f32 %v412, %v412
      %v417 = vsel %vm392, %v413, 0.0
      %418 = vadd.xlane.f32.xlu0 %v417
      %v419 = vpop.xlane.xlu0 %418
      %v420 = vsel %vm392, %v414, 0.0
      %421 = vadd.xlane.f32.xlu0 %v420
      %v422 = vpop.xlane.xlu0 %421
      %v423 = vsel %vm392, %v415, 0.0
      %424 = vadd.xlane.f32.xlu0 %v423
      %v425 = vpop.xlane.xlu0 %424
      %v426 = vsel %vm392, %v416, 0.0
      %427 = vadd.xlane.f32.xlu0 %v426
      %v428 = vpop.xlane.xlu0 %427
      %vm429 = vcmask 7168
      %430 = vst.msk [vmem:[%s225] sm:$0xff] %vm429, %v395
      %431 = vst.msk [vmem:[%s225 + $0x8] sm:$0xff] %vm429, %v398
      %432 = vst.msk [vmem:[%s225 + $0x10] sm:$0xff] %vm429, %v401
      %433 = vst.msk [vmem:[%s225 + $0x18] sm:$0xff] %vm429, %v404
      %434 = vst.msk [vmem:[%s230] sm:$0xff] %vm429, %v419
      %435 = vst.msk [vmem:[%s230 + $0x8] sm:$0xff] %vm429, %v422
      %436 = vst.msk [vmem:[%s230 + $0x10] sm:$0xff] %vm429, %v425
      %437 = vst.msk [vmem:[%s230 + $0x18] sm:$0xff] %vm429, %v428
      %p438 = scmp.lt.s32.totalorder %s16, 1
      %s439 = scalar_select %p438, %s16, 1
      %s440 = smul.addr %s439, 4
      %s441 = smul.addr %s440, 8
      %s442 = scalar_lea.vmem %s3, %s441
      %p443 = scmp.lt.s32.totalorder %s16, 1
      %s444 = scalar_select %p443, %s16, 1
      %s445 = smul.addr %s444, 4
      %s446 = smul.addr %s445, 8
      %s447 = scalar_lea.vmem %s4, %s446
      // Predicated region
      $region33: #{tpu_custom_call.1} parent=31 // pred_check
        %p448 = pneg %p107
      $region34: #{tpu_custom_call.1} parent=31 // pred_check_branch
        %450 = sbr.rel (%p448) target = $region36
      $region35: #{tpu_custom_call.1} parent=31 // pred_region
        _
      $region36: #{tpu_custom_call.1} parent=31 // pred_fallthru
        _
      // Predicated region
      $region37: #{tpu_custom_call.1} parent=31 // pred_check
        %p451 = pneg %p133
      $region38: #{tpu_custom_call.1} parent=31 // pred_check_branch
        %453 = sbr.rel (%p451) target = $region40
      $region39: #{tpu_custom_call.1} parent=31 // pred_region
        _
      $region40: #{tpu_custom_call.1} parent=31 // pred_fallthru
        _
    $region32: #{tpu_custom_call.1} parent=5 // pred_fallthru
      _
    %p454 = scmp.le.s32.totalorder 2, %s11
    // Predicated region
    $region41: #{tpu_custom_call.1} parent=5 // pred_check
      %p455 = pneg %p454
    $region42: #{tpu_custom_call.1} parent=5 // pred_check_branch
      %457 = sbr.rel (%p455) target = $region44
    $region43: #{tpu_custom_call.1} parent=5 // pred_region
      %s458 = ssub.s32 %s11, 2
      // Predicated region
      $region45: #{tpu_custom_call.1} parent=43 // pred_check
        %p459 = pneg %p113
      $region46: #{tpu_custom_call.1} parent=43 // pred_check_branch
        %461 = sbr.rel (%p459) target = $region48
      $region47: #{tpu_custom_call.1} parent=43 // pred_region
        %p462 = scmp.lt.s32.totalorder %s17, 1
        %s463 = scalar_select %p462, %s17, 1
        %s464 = smul.addr %s463, 4
        %s465 = smul.addr %s464, 8
        %s466 = scalar_lea.vmem %s3, %s465
      $region48: #{tpu_custom_call.1} parent=43 // pred_fallthru
        _
      // Predicated region
      $region49: #{tpu_custom_call.1} parent=43 // pred_check
        %p467 = pneg %p139
      $region50: #{tpu_custom_call.1} parent=43 // pred_check_branch
        %469 = sbr.rel (%p467) target = $region52
      $region51: #{tpu_custom_call.1} parent=43 // pred_region
        %p470 = scmp.lt.s32.totalorder %s17, 1
        %s471 = scalar_select %p470, %s17, 1
        %s472 = smul.addr %s471, 4
        %s473 = smul.addr %s472, 8
        %s474 = scalar_lea.vmem %s4, %s473
      $region52: #{tpu_custom_call.1} parent=43 // pred_fallthru
        _
    $region44: #{tpu_custom_call.1} parent=5 // pred_fallthru
      _
  $region6: #{tpu_custom_call.1} parent=0 // loop_footer
    %s15 = sadd.s32 1, %s11
  $region7: #{tpu_custom_call.1} parent=0 // loop_footer_branch
    %10 = sbr.rel target = $region3
  $region8: #{tpu_custom_call.1} parent=0 // loop_exit
    _

</llo_original>
